<compile_context>
chip_gen: v7x
topology: tpu7x:2x2x1
jax: 0.10.0
libtpu: 0.0.40
codegen_flags: <defaults>
</compile_context>

<pallas_src>
import numpy as np
import jax
import jax.numpy as jnp
from jax.experimental import pallas as pl
from jax.experimental.pallas import tpu as pltpu


# ---------------------------------------------------------------------------
# Host-side construction of the (linear) pool / upsample operators.
# ---------------------------------------------------------------------------

def avg_pool_window_matrix(size, pool_size):
    """Binary (pool_size, size) window-membership matrix matching F.avg_pool2d
    with stride = size // pool_size, k = size - stride*(pool_size-1) (exactly
    the formula used in pyramidPooling.forward).  Returns the 0/1 matrix and
    the window length k; the 1/k normalisation is folded into the f32 conv
    weights so this matrix stays exact in bf16."""
    stride = size // pool_size
    assert stride >= 1, "pool_size must be <= spatial size"
    k = size - stride * (pool_size - 1)
    A = np.zeros((pool_size, size), np.float32)
    for p in range(pool_size):
        A[p, p * stride: p * stride + k] = 1.0
    return A, k


def bilinear_upsample_matrix(size, pool_size):
    """U (size, pool_size) s.t. U @ v upsamples v to `size` with bilinear
    interpolation, align_corners=True (PyTorch semantics)."""
    U = np.zeros((size, pool_size), np.float32)
    if pool_size == 1:
        U[:, 0] = 1.0
        return U
    scale = (pool_size - 1) / (size - 1)
    for i in range(size):
        src = i * scale
        i0 = min(int(np.floor(src)), pool_size - 1)
        i1 = min(i0 + 1, pool_size - 1)
        f = src - i0
        U[i, i0] += 1.0 - f
        U[i, i1] += f
    return U


# ---------------------------------------------------------------------------
# Stage 1 kernel: fused adaptive avg-pool (all branches) + 1x1 conv + BN + ReLU
# ---------------------------------------------------------------------------

def _pool_conv_kernel(x_ref, mp_ref, w_ref, shift_ref, z_ref, acc_ref):
    # x_ref:     (Ct, HW)        x.dtype (cast to bf16 in-kernel)
    # mp_ref:    (HW, Bb*PP)     bf16, exact 0/1 pooling windows, all branches
    # w_ref:     (Bb, O, Ct)     bf16, conv W with BN scale and 1/(kh*kw) folded
    # shift_ref: (Bb, O, 1)      f32, folded BatchNorm shift
    # z_ref:     (Bb, O, PP)     bf16 output: relu(conv(pool(x))) in pooled space
    # acc_ref:   (Bb, O, PP)     f32 conv accumulator over channel chunks
    bb, o_ch, pp = acc_ref.shape
    cc = pl.program_id(1)

    @pl.when(cc == 0)
    def _init():
        acc_ref[...] = jnp.zeros_like(acc_ref)

    # Fused adaptive-avg-pool for ALL branches: a single lane-dense MXU matmul;
    # x is read from HBM exactly once (no per-branch re-streaming).
    xc = x_ref[...].astype(jnp.bfloat16)                              # (Ct, HW)
    pooled = jnp.dot(xc, mp_ref[...],
                     preferred_element_type=jnp.float32)              # (Ct, Bb*PP)
    pooled = pooled.astype(jnp.bfloat16)

    # Per-branch 1x1 conv (BN scale + window normalisation folded into W),
    # accumulated over channel chunks.  Static lane slices only - no concat
    # relayouts in the reduction hot loop.
    for b in range(bb):
        acc_ref[b] += jnp.dot(w_ref[b], pooled[:, b * pp:(b + 1) * pp],
                              preferred_element_type=jnp.float32)     # (O, PP)

    @pl.when(cc == pl.num_programs(1) - 1)
    def _finish():
        # folded BatchNorm shift + ReLU in f32, stored bf16 for the upsample.
        # TODO(synk): training-mode BatchNorm (batch statistics) not reproduced.
        z_ref[...] = jnp.maximum(acc_ref[...] + shift_ref[...], 0.0
                                 ).astype(z_ref.dtype)


# ---------------------------------------------------------------------------
# Stage 2 kernel: bilinear upsample (align_corners=True), HW-tiled, lane-dense
# ---------------------------------------------------------------------------

def _upsample_kernel(z_ref, mu_ref, o_ref):
    # z_ref:  (O, PP)   bf16
    # mu_ref: (PP, HWt) bf16 bilinear weights for this branch / HW tile
    # o_ref:  (O, HWt)  x.dtype, lane-dense output tile
    up = jnp.dot(z_ref[...], mu_ref[...], preferred_element_type=jnp.float32)
    o_ref[...] = up.astype(o_ref.dtype)


# ---------------------------------------------------------------------------
# Wrapper
# ---------------------------------------------------------------------------

def _vmem_capacity_bytes():
    try:
        return int(pltpu.get_tpu_info().vmem_capacity_bytes)
    except Exception:
        return 64 * 1024 * 1024          # v7x worst case


def _choose_c_tile(C, HW, Bb, O, PP, x_bytes, budget):
    """Largest channel chunk whose stage-1 VMEM footprint fits the budget."""
    def est(ct):
        return (2 * ct * HW * x_bytes            # x block (double-buffered)
                + 2 * HW * Bb * PP * 2           # pool matrix
                + 2 * Bb * O * ct * 2            # conv-weight block
                + 2 * Bb * O * PP * 2            # z output block
                + Bb * O * PP * 4                # f32 accumulator
                + ct * Bb * PP * 6               # pooled temp (f32 + bf16)
                + (2 << 20))                     # headroom
    # Last dims of the x / W blocks must be (8,128)-legal: use divisors of C
    # that are multiples of 128, or C itself (full dimension).
    cands = sorted({d for d in range(1, C + 1)
                    if C % d == 0 and (d % 128 == 0 or d == C)}, reverse=True)
    for ct in cands:
        if est(ct) <= budget:
            return ct
    return cands[-1]                      # smallest legal tile; best effort


def pyramid_pooling(x, pool_sizes, conv_w, bn_gamma, bn_beta, bn_mean, bn_var,
                    eps=1e-5):
    """Forward of ptsemseg pyramidPooling (eval-mode BatchNorm, folded)."""
    N, C, H, W = x.shape
    Bb = len(pool_sizes)
    O = conv_w.shape[1]                      # = in_channels // len(pool_sizes)
    assert conv_w.shape == (Bb, O, C)
    P = max(pool_sizes)
    PP = P * P
    HW = H * W

    # ---- pooling / upsampling operators, branches fused along one lane axis --
    mp = np.zeros((Bb, HW, PP), np.float32)     # pooled = x_flat @ mp (0/1)
    mu = np.zeros((Bb, PP, HW), np.float32)     # out    = z      @ mu
    inv_area = np.zeros((Bb, 1, 1), np.float32)
    for i, ps in enumerate(pool_sizes):
        Ah, kh = avg_pool_window_matrix(H, ps)
        Aw, kw = avg_pool_window_matrix(W, ps)
        Uh = bilinear_upsample_matrix(H, ps)
        Uw = bilinear_upsample_matrix(W, ps)
        inv_area[i] = 1.0 / (kh * kw)
        mp_i = np.zeros((H, W, P, P), np.float32)
        mp_i[:, :, :ps, :ps] = np.einsum('ph,qw->hwpq', Ah, Aw)
        mp[i] = mp_i.reshape(HW, PP)
        mu_i = np.zeros((P, P, H, W), np.float32)
        mu_i[:ps, :ps] = np.einsum('hp,wq->pqhw', Uh, Uw)
        mu[i] = mu_i.reshape(PP, HW)
    # all-branch pool matrix: columns [b*PP : (b+1)*PP] belong to branch b.
    mp_all = np.transpose(mp, (1, 0, 2)).reshape(HW, Bb * PP)

    # ---- fold eval-mode BatchNorm and the 1/(kh*kw) averaging into the conv --
    scale = np.asarray(bn_gamma, np.float32) / np.sqrt(
        np.asarray(bn_var, np.float32) + eps)
    shift = np.asarray(bn_beta, np.float32) - np.asarray(bn_mean, np.float32) * scale
    w_folded = np.asarray(conv_w, np.float32) * scale[:, :, None] * inv_area   # (Bb,O,C)

    mp_bf = jnp.asarray(mp_all, jnp.bfloat16)        # exact: entries are 0/1
    mu_bf = jnp.asarray(mu, jnp.bfloat16)
    w_bf = jnp.asarray(w_folded, jnp.bfloat16)
    shift_j = jnp.asarray(shift, jnp.float32)[:, :, None]            # (Bb, O, 1)

    # x stays in its native dtype (reshape is free); the kernel casts to bf16,
    # so x is streamed from HBM exactly once with no wrapper cast pass.
    x3 = x.reshape(N, C, HW)
    x_bytes = jnp.dtype(x.dtype).itemsize

    # ---- per-generation VMEM budget -> channel-chunk size --------------------
    vmem_cap = _vmem_capacity_bytes()
    c_tile = _choose_c_tile(C, HW, Bb, O, PP, x_bytes,
                            budget=int(vmem_cap * 0.55))
    ncc = C // c_tile

    # ---- stage 1: fused pool + 1x1 conv + BN + ReLU (channel reduction) ------
    z = pl.pallas_call(
        _pool_conv_kernel,
        out_shape=jax.ShapeDtypeStruct((N, Bb, O, PP), jnp.bfloat16),
        grid_spec=pltpu.PrefetchScalarGridSpec(
            num_scalar_prefetch=0,
            grid=(N, ncc),
            in_specs=[
                pl.BlockSpec((None, c_tile, HW), lambda n, cc: (n, cc, 0)),   # x
                pl.BlockSpec((HW, Bb * PP), lambda n, cc: (0, 0)),            # pool mat
                pl.BlockSpec((Bb, O, c_tile), lambda n, cc: (0, 0, cc)),      # conv W
                pl.BlockSpec((Bb, O, 1), lambda n, cc: (0, 0, 0)),            # BN shift
            ],
            out_specs=pl.BlockSpec((None, Bb, O, PP), lambda n, cc: (n, 0, 0, 0)),
            scratch_shapes=[pltpu.VMEM((Bb, O, PP), jnp.float32)],
        ),
        compiler_params=pltpu.CompilerParams(
            dimension_semantics=("parallel", "arbitrary"),
            vmem_limit_bytes=int(vmem_cap * 0.8)),
    )(x3, mp_bf, w_bf, shift_j)

    # ---- stage 2: bilinear upsample back to (H, W), lane-dense HW tiles ------
    hw_tile = HW if HW <= 2048 else 2048           # multiple of 128 or full HW
    J = pl.cdiv(HW, hw_tile)
    branch = pl.pallas_call(
        _upsample_kernel,
        out_shape=jax.ShapeDtypeStruct((N, Bb, O, HW), x.dtype),
        grid_spec=pltpu.PrefetchScalarGridSpec(
            num_scalar_prefetch=0,
            grid=(N, Bb, J),
            in_specs=[
                pl.BlockSpec((None, None, O, PP), lambda n, b, j: (n, b, 0, 0)),  # z
                pl.BlockSpec((None, PP, hw_tile), lambda n, b, j: (b, 0, j)),     # mu
            ],
            out_specs=pl.BlockSpec((None, None, O, hw_tile),
                                   lambda n, b, j: (n, b, 0, j)),
        ),
        compiler_params=pltpu.CompilerParams(
            dimension_semantics=("parallel", "parallel", "parallel")),
    )(z, mu_bf)

    # (N, Bb, O, HW) -> (N, Bb*O, H, W) is a pure reshape, then channel-concat
    # with x exactly like torch.cat([x, *branches], dim=1).
    # TODO(synk): the concat could be fused away by writing stage-2 output at a
    # channel offset into a pre-placed buffer (input_output_aliases).
    branch = branch.reshape(N, Bb * O, H, W)
    return jnp.concatenate([x, branch], axis=1)


if __name__ == "__main__":
    N, C, H, W = 2, 8, 16, 16
    pool_sizes = (1, 2, 4, 8)
    Bb = len(pool_sizes)
    O = C // Bb

    key = jax.random.PRNGKey(0)
    kx, kw = jax.random.split(key)
    x = jax.random.normal(kx, (N, C, H, W), jnp.float32)
    conv_w = 0.3 * jax.random.normal(kw, (Bb, O, C), jnp.float32)

    bn_gamma = (1.0 + 0.1 * np.arange(Bb * O)).astype(np.float32).reshape(Bb, O)
    bn_beta = (0.05 * np.arange(Bb * O) - 0.1).astype(np.float32).reshape(Bb, O)
    bn_mean = (0.02 * np.arange(Bb * O)).astype(np.float32).reshape(Bb, O)
    bn_var = (1.0 + 0.03 * np.arange(Bb * O)).astype(np.float32).reshape(Bb, O)

    out = pyramid_pooling(x, pool_sizes, np.asarray(conv_w),
                          bn_gamma, bn_beta, bn_mean, bn_var)
    out = jax.block_until_ready(out)

    # pure-numpy f32 reference (independent per-branch path, 1/k-normalised)
    x_np = np.asarray(x)
    w_np = np.asarray(conv_w)
    eps = 1e-5
    scale = bn_gamma / np.sqrt(bn_var + eps)
    shift = bn_beta - bn_mean * scale
    slices = [x_np]
    for i, ps in enumerate(pool_sizes):
        Ah, kh = avg_pool_window_matrix(H, ps)
        Aw, kw_ = avg_pool_window_matrix(W, ps)
        Uh = bilinear_upsample_matrix(H, ps)
        Uw = bilinear_upsample_matrix(W, ps)
        pooled = np.einsum('ph,nchw,qw->ncpq', Ah / kh, x_np, Aw / kw_)
        y = np.einsum('oc,ncpq->nopq', w_np[i], pooled)
        z = np.maximum(y * scale[i][None, :, None, None]
                       + shift[i][None, :, None, None], 0.0)
        slices.append(np.einsum('hp,nopq,wq->nohw', Uh, z, Uw))
    ref = np.concatenate(slices, axis=1)

    assert out.shape == ref.shape, (out.shape, ref.shape)
    # bf16 MXU inputs (x, conv weights, bilinear fractions); pool windows are
    # exact 0/1 with the 1/k factor folded into f32 weights -> tighter than the
    # previous version.
    np.testing.assert_allclose(np.asarray(out), ref, rtol=2e-2, atol=2e-2)
    print("KERNEL_OK")
</pallas_src>

<mosaic_0001>
module attributes {stable_mosaic.version = 11 : i64} {
  func.func @_pool_conv_kernel(%arg0: i32, %arg1: i32, %arg2: memref<1x8x256xf32, #tpu.memory_space<vmem>>, %arg3: memref<256x256xbf16, #tpu.memory_space<vmem>>, %arg4: memref<4x2x8xbf16, #tpu.memory_space<vmem>>, %arg5: memref<4x2x1xf32, #tpu.memory_space<vmem>>, %arg6: memref<1x4x2x64xbf16, #tpu.memory_space<vmem>>, %arg7: memref<4x2x64xf32, #tpu.memory_space<vmem>>) attributes {dimension_semantics = [#tpu.dimension_semantics<parallel>, #tpu.dimension_semantics<arbitrary>], iteration_bounds = array<i64: 2, 1>, scalar_prefetch = 0 : i64, scratch_operands = 1 : i64, tpu.core_type = #tpu.core_type<tc>, window_params = [{transform_indices = @transform_0, window_bounds = array<i64: 1, 8, 256>}, {pipeline_mode = #tpu.pipeline_mode<synchronous>, transform_indices = @transform_1, window_bounds = array<i64: 256, 256>}, {transform_indices = @transform_2, window_bounds = array<i64: 4, 2, 8>}, {pipeline_mode = #tpu.pipeline_mode<synchronous>, transform_indices = @transform_3, window_bounds = array<i64: 4, 2, 1>}, {transform_indices = @transform_4, window_bounds = array<i64: 1, 4, 2, 64>}]} {
    %c0_i32 = arith.constant 0 : i32
    %0 = arith.cmpi eq, %arg1, %c0_i32 : i32
    %1 = arith.extui %0 : i1 to i32
    %c0_i32_0 = arith.constant 0 : i32
    %2 = arith.cmpi ne, %1, %c0_i32_0 : i32
    scf.if %2 {
      %cst_44 = arith.constant 0.000000e+00 : f32
      %52 = vector.broadcast %cst_44 : f32 to vector<4x2x64xf32>
      %c0_45 = arith.constant 0 : index
      %c0_46 = arith.constant 0 : index
      %c0_47 = arith.constant 0 : index
      %53 = vector.load %arg7[%c0_45, %c0_46, %c0_47] : memref<4x2x64xf32, #tpu.memory_space<vmem>>, vector<4x2x64xf32>
      tpu.vector_store %arg7[%c0_45, %c0_46, %c0_47], %52 {strides = array<i32>} : memref<4x2x64xf32, #tpu.memory_space<vmem>>, vector<4x2x64xf32>,
    } else {
    }
    %c0 = arith.constant 0 : index
    %c0_1 = arith.constant 0 : index
    %c0_2 = arith.constant 0 : index
    %3 = vector.load %arg2[%c0, %c0_1, %c0_2] : memref<1x8x256xf32, #tpu.memory_space<vmem>>, vector<1x8x256xf32>
    %4 = vector.shape_cast %3 : vector<1x8x256xf32> to vector<8x256xf32>
    %5 = arith.truncf %4 : vector<8x256xf32> to vector<8x256xbf16>
    %c0_3 = arith.constant 0 : index
    %c0_4 = arith.constant 0 : index
    %6 = vector.load %arg3[%c0_3, %c0_4] : memref<256x256xbf16, #tpu.memory_space<vmem>>, vector<256x256xbf16>
    %cst = arith.constant dense<0.000000e+00> : vector<8x256xf32>
    %7 = tpu.matmul %5, %6, %cst {dimension_numbers = #tpu.dot_dimension_numbers<[1], [0], [0], [1], [0, 0, 1, 1], [], []>} : vector<8x256xbf16>, vector<256x256xbf16>, vector<8x256xf32> -> vector<8x256xf32>
    %8 = arith.truncf %7 : vector<8x256xf32> to vector<8x256xbf16>
    %c0_5 = arith.constant 0 : index
    %c0_6 = arith.constant 0 : index
    %c0_7 = arith.constant 0 : index
    %9 = vector.load %arg7[%c0_5, %c0_6, %c0_7] : memref<4x2x64xf32, #tpu.memory_space<vmem>>, vector<1x2x64xf32>
    %10 = vector.shape_cast %9 : vector<1x2x64xf32> to vector<2x64xf32>
    %c0_8 = arith.constant 0 : index
    %c0_9 = arith.constant 0 : index
    %c0_10 = arith.constant 0 : index
    %11 = vector.load %arg4[%c0_8, %c0_9, %c0_10] : memref<4x2x8xbf16, #tpu.memory_space<vmem>>, vector<1x2x8xbf16>
    %12 = vector.shape_cast %11 : vector<1x2x8xbf16> to vector<2x8xbf16>
    %13 = vector.extract_strided_slice %8 {offsets = [0, 0], sizes = [8, 64], strides = [1, 1]} : vector<8x256xbf16> to vector<8x64xbf16>
    %cst_11 = arith.constant dense<0.000000e+00> : vector<2x64xf32>
    %14 = tpu.matmul %12, %13, %cst_11 {dimension_numbers = #tpu.dot_dimension_numbers<[1], [0], [0], [1], [0, 0, 1, 1], [], []>} : vector<2x8xbf16>, vector<8x64xbf16>, vector<2x64xf32> -> vector<2x64xf32>
    %15 = arith.addf %10, %14 : vector<2x64xf32>
    %c0_12 = arith.constant 0 : index
    %c0_13 = arith.constant 0 : index
    %c0_14 = arith.constant 0 : index
    %16 = vector.load %arg7[%c0_12, %c0_13, %c0_14] : memref<4x2x64xf32, #tpu.memory_space<vmem>>, vector<1x2x64xf32>
    %17 = vector.shape_cast %16 : vector<1x2x64xf32> to vector<2x64xf32>
    %18 = vector.shape_cast %15 : vector<2x64xf32> to vector<1x2x64xf32>
    tpu.vector_store %arg7[%c0_12, %c0_13, %c0_14], %18 {strides = array<i32>} : memref<4x2x64xf32, #tpu.memory_space<vmem>>, vector<1x2x64xf32>,
    %c1 = arith.constant 1 : index
    %c0_15 = arith.constant 0 : index
    %c0_16 = arith.constant 0 : index
    %19 = vector.load %arg7[%c1, %c0_15, %c0_16] : memref<4x2x64xf32, #tpu.memory_space<vmem>>, vector<1x2x64xf32>
    %20 = vector.shape_cast %19 : vector<1x2x64xf32> to vector<2x64xf32>
    %c1_17 = arith.constant 1 : index
    %c0_18 = arith.constant 0 : index
    %c0_19 = arith.constant 0 : index
    %21 = vector.load %arg4[%c1_17, %c0_18, %c0_19] : memref<4x2x8xbf16, #tpu.memory_space<vmem>>, vector<1x2x8xbf16>
    %22 = vector.shape_cast %21 : vector<1x2x8xbf16> to vector<2x8xbf16>
    %23 = vector.extract_strided_slice %8 {offsets = [0, 64], sizes = [8, 64], strides = [1, 1]} : vector<8x256xbf16> to vector<8x64xbf16>
    %cst_20 = arith.constant dense<0.000000e+00> : vector<2x64xf32>
    %24 = tpu.matmul %22, %23, %cst_20 {dimension_numbers = #tpu.dot_dimension_numbers<[1], [0], [0], [1], [0, 0, 1, 1], [], []>} : vector<2x8xbf16>, vector<8x64xbf16>, vector<2x64xf32> -> vector<2x64xf32>
    %25 = arith.addf %20, %24 : vector<2x64xf32>
    %c1_21 = arith.constant 1 : index
    %c0_22 = arith.constant 0 : index
    %c0_23 = arith.constant 0 : index
    %26 = vector.load %arg7[%c1_21, %c0_22, %c0_23] : memref<4x2x64xf32, #tpu.memory_space<vmem>>, vector<1x2x64xf32>
    %27 = vector.shape_cast %26 : vector<1x2x64xf32> to vector<2x64xf32>
    %28 = vector.shape_cast %25 : vector<2x64xf32> to vector<1x2x64xf32>
    tpu.vector_store %arg7[%c1_21, %c0_22, %c0_23], %28 {strides = array<i32>} : memref<4x2x64xf32, #tpu.memory_space<vmem>>, vector<1x2x64xf32>,
    %c2 = arith.constant 2 : index
    %c0_24 = arith.constant 0 : index
    %c0_25 = arith.constant 0 : index
    %29 = vector.load %arg7[%c2, %c0_24, %c0_25] : memref<4x2x64xf32, #tpu.memory_space<vmem>>, vector<1x2x64xf32>
    %30 = vector.shape_cast %29 : vector<1x2x64xf32> to vector<2x64xf32>
    %c2_26 = arith.constant 2 : index
    %c0_27 = arith.constant 0 : index
    %c0_28 = arith.constant 0 : index
    %31 = vector.load %arg4[%c2_26, %c0_27, %c0_28] : memref<4x2x8xbf16, #tpu.memory_space<vmem>>, vector<1x2x8xbf16>
    %32 = vector.shape_cast %31 : vector<1x2x8xbf16> to vector<2x8xbf16>
    %33 = vector.extract_strided_slice %8 {offsets = [0, 128], sizes = [8, 64], strides = [1, 1]} : vector<8x256xbf16> to vector<8x64xbf16>
    %cst_29 = arith.constant dense<0.000000e+00> : vector<2x64xf32>
    %34 = tpu.matmul %32, %33, %cst_29 {dimension_numbers = #tpu.dot_dimension_numbers<[1], [0], [0], [1], [0, 0, 1, 1], [], []>} : vector<2x8xbf16>, vector<8x64xbf16>, vector<2x64xf32> -> vector<2x64xf32>
    %35 = arith.addf %30, %34 : vector<2x64xf32>
    %c2_30 = arith.constant 2 : index
    %c0_31 = arith.constant 0 : index
    %c0_32 = arith.constant 0 : index
    %36 = vector.load %arg7[%c2_30, %c0_31, %c0_32] : memref<4x2x64xf32, #tpu.memory_space<vmem>>, vector<1x2x64xf32>
    %37 = vector.shape_cast %36 : vector<1x2x64xf32> to vector<2x64xf32>
    %38 = vector.shape_cast %35 : vector<2x64xf32> to vector<1x2x64xf32>
    tpu.vector_store %arg7[%c2_30, %c0_31, %c0_32], %38 {strides = array<i32>} : memref<4x2x64xf32, #tpu.memory_space<vmem>>, vector<1x2x64xf32>,
    %c3 = arith.constant 3 : index
    %c0_33 = arith.constant 0 : index
    %c0_34 = arith.constant 0 : index
    %39 = vector.load %arg7[%c3, %c0_33, %c0_34] : memref<4x2x64xf32, #tpu.memory_space<vmem>>, vector<1x2x64xf32>
    %40 = vector.shape_cast %39 : vector<1x2x64xf32> to vector<2x64xf32>
    %c3_35 = arith.constant 3 : index
    %c0_36 = arith.constant 0 : index
    %c0_37 = arith.constant 0 : index
    %41 = vector.load %arg4[%c3_35, %c0_36, %c0_37] : memref<4x2x8xbf16, #tpu.memory_space<vmem>>, vector<1x2x8xbf16>
    %42 = vector.shape_cast %41 : vector<1x2x8xbf16> to vector<2x8xbf16>
    %43 = vector.extract_strided_slice %8 {offsets = [0, 192], sizes = [8, 64], strides = [1, 1]} : vector<8x256xbf16> to vector<8x64xbf16>
    %cst_38 = arith.constant dense<0.000000e+00> : vector<2x64xf32>
    %44 = tpu.matmul %42, %43, %cst_38 {dimension_numbers = #tpu.dot_dimension_numbers<[1], [0], [0], [1], [0, 0, 1, 1], [], []>} : vector<2x8xbf16>, vector<8x64xbf16>, vector<2x64xf32> -> vector<2x64xf32>
    %45 = arith.addf %40, %44 : vector<2x64xf32>
    %c3_39 = arith.constant 3 : index
    %c0_40 = arith.constant 0 : index
    %c0_41 = arith.constant 0 : index
    %46 = vector.load %arg7[%c3_39, %c0_40, %c0_41] : memref<4x2x64xf32, #tpu.memory_space<vmem>>, vector<1x2x64xf32>
    %47 = vector.shape_cast %46 : vector<1x2x64xf32> to vector<2x64xf32>
    %48 = vector.shape_cast %45 : vector<2x64xf32> to vector<1x2x64xf32>
    tpu.vector_store %arg7[%c3_39, %c0_40, %c0_41], %48 {strides = array<i32>} : memref<4x2x64xf32, #tpu.memory_space<vmem>>, vector<1x2x64xf32>,
    %c0_i32_42 = arith.constant 0 : i32
    %49 = arith.cmpi eq, %arg1, %c0_i32_42 : i32
    %50 = arith.extui %49 : i1 to i32
    %c0_i32_43 = arith.constant 0 : i32
    %51 = arith.cmpi ne, %50, %c0_i32_43 : i32
    scf.if %51 {
      %c0_44 = arith.constant 0 : index
      %c0_45 = arith.constant 0 : index
      %c0_46 = arith.constant 0 : index
      %52 = vector.load %arg7[%c0_44, %c0_45, %c0_46] : memref<4x2x64xf32, #tpu.memory_space<vmem>>, vector<4x2x64xf32>
      %c0_47 = arith.constant 0 : index
      %c0_48 = arith.constant 0 : index
      %c0_49 = arith.constant 0 : index
      %53 = vector.load %arg5[%c0_47, %c0_48, %c0_49] : memref<4x2x1xf32, #tpu.memory_space<vmem>>, vector<4x2x1xf32>
      %54 = vector.broadcast %53 : vector<4x2x1xf32> to vector<4x2x64xf32>
      %55 = arith.addf %52, %54 : vector<4x2x64xf32>
      %cst_50 = arith.constant 0.000000e+00 : f32
      %56 = vector.broadcast %cst_50 : f32 to vector<4x2x64xf32>
      %57 = arith.maximumf %55, %56 : vector<4x2x64xf32>
      %58 = arith.truncf %57 : vector<4x2x64xf32> to vector<4x2x64xbf16>
      %c0_51 = arith.constant 0 : index
      %c0_52 = arith.constant 0 : index
      %c0_53 = arith.constant 0 : index
      %c0_54 = arith.constant 0 : index
      %59 = vector.load %arg6[%c0_51, %c0_52, %c0_53, %c0_54] : memref<1x4x2x64xbf16, #tpu.memory_space<vmem>>, vector<1x4x2x64xbf16>
      %60 = vector.shape_cast %59 : vector<1x4x2x64xbf16> to vector<4x2x64xbf16>
      %61 = vector.shape_cast %58 : vector<4x2x64xbf16> to vector<1x4x2x64xbf16>
      tpu.vector_store %arg6[%c0_51, %c0_52, %c0_53, %c0_54], %61 {strides = array<i32>} : memref<1x4x2x64xbf16, #tpu.memory_space<vmem>>, vector<1x4x2x64xbf16>,
    } else {
    }
    return
  }
  func.func @transform_0(%arg0: i32, %arg1: i32) -> (i32, i32, i32) {
    %c0_i32 = arith.constant 0 : i32
    %c0_i32_0 = arith.constant 0 : i32
    return %arg0, %arg1, %c0_i32 : i32, i32, i32
  }
  func.func @transform_1(%arg0: i32, %arg1: i32) -> (i32, i32) {
    %c0_i32 = arith.constant 0 : i32
    %c0_i32_0 = arith.constant 0 : i32
    %c0_i32_1 = arith.constant 0 : i32
    return %c0_i32, %c0_i32_0 : i32, i32
  }
  func.func @transform_2(%arg0: i32, %arg1: i32) -> (i32, i32, i32) {
    %c0_i32 = arith.constant 0 : i32
    %c0_i32_0 = arith.constant 0 : i32
    %c0_i32_1 = arith.constant 0 : i32
    return %c0_i32, %c0_i32_0, %arg1 : i32, i32, i32
  }
  func.func @transform_3(%arg0: i32, %arg1: i32) -> (i32, i32, i32) {
    %c0_i32 = arith.constant 0 : i32
    %c0_i32_0 = arith.constant 0 : i32
    %c0_i32_1 = arith.constant 0 : i32
    %c0_i32_2 = arith.constant 0 : i32
    return %c0_i32, %c0_i32_0, %c0_i32_1 : i32, i32, i32
  }
  func.func @transform_4(%arg0: i32, %arg1: i32) -> (i32, i32, i32, i32) {
    %c0_i32 = arith.constant 0 : i32
    %c0_i32_0 = arith.constant 0 : i32
    %c0_i32_1 = arith.constant 0 : i32
    %c0_i32_2 = arith.constant 0 : i32
    return %arg0, %c0_i32, %c0_i32_0, %c0_i32_1 : i32, i32, i32, i32
  }
}

</mosaic_0001>

<llo_original>
// kernel: tpu_custom_call.1
$region0: #{tpu_custom_call.1}
  #allocation0 [shape = 'u32[]', space=smem, size = 0x4, offset = 0x4, fixed_abs, tag = 'smem constant byte address 0x4 - core index']
  #allocation1 [shape = 'u32[144,128]{1,0:T(1,128)}', space=vmem, size = 0x12000, scoped, tag = 'internal scratch']
  #allocation2 [shape = 'f32[4,2,64]{2,1,0:T(2,128)}', space=vmem, size = 0x1000, scoped, tag = 'scratch operand']
  %s0 = inlined_call_operand.hbm [shape: f32[2,8,256], index: 0, kind: input, shape index: {}]
  %s1 = inlined_call_operand.hbm [shape: bf16[256,256], index: 1, kind: input, shape index: {}]
  %s2 = inlined_call_operand.vmem [shape: bf16[4,2,8], index: 2, kind: input, shape index: {}]
  %s3 = inlined_call_operand.vmem [shape: f32[4,2,1], index: 3, kind: input, shape index: {}]
  %s4 = inlined_call_operand.hbm [shape: bf16[2,4,2,64], index: 4, kind: output, shape index: {}]
  %s5 = sld [smem:[#allocation0]]
  $region65: #{tpu_custom_call.1} parent=0
    _
  %s7 = ssub.s32 1, %s5
  %s8 = scalar_select 0, %s7, %s5
  $region1: #{tpu_custom_call.1} parent=0
    #allocation3 [shape = 'u8[16384]{0}', space=vmem, size = 0x4000, scoped, tag = 'input window, operand 0']
    #allocation4 [shape = 's32[2]{0}', space=sflag, size = 0x8, scoped, tag = 'scoped memory for tpu_custom_call.1']
    #allocation5 [shape = 's32[2]{0}', space=sflag, size = 0x8, scoped, tag = 'scoped memory for tpu_custom_call.1']
    #allocation6 [shape = 'u8[131072]{0}', space=vmem, size = 0x20000, scoped, tag = 'input window, operand 1, single buffered']
    #allocation7 [shape = 's32[1]{0}', space=sflag, size = 0x4, scoped, tag = 'scoped memory for tpu_custom_call.1']
    #allocation8 [shape = 'u8[4096]{0}', space=vmem, size = 0x1000, scoped, tag = 'output window, operand 0']
    %9 = vsyncpa [#allocation4], 0
    %s10 = scalar_lea.sflag [#allocation4], 1
    %11 = vsyncpa %s10, 0
    %12 = vsyncpa [#allocation7], 0
    %13 = vsyncpa [#allocation5], 0
    %s14 = scalar_lea.sflag [#allocation5], 1
    %15 = vsyncpa %s14, 0
    loop: start=0, step=1, limit=4
    $region2: #{tpu_custom_call.1} parent=1 // loop_pre_header
      _
    $region3: #{tpu_custom_call.1} parent=1 // loop_header
      %s17 = sphi 0, %s21
      %p18 = scmp.ge.s32.totalorder %s17, 4
      %s24 = sphi 0, %s36
      %s25 = sphi 0, %s32
      %s26 = sphi 0, %s24
      %s27 = sphi 0, %s25
      %s28 = sphi 0, %s26
      %s29 = sphi 0, %s27
      %s41 = sphi 0, %s43
      %s44 = sphi 0, %s41
      %s45 = sphi 0, %s44
      %s61 = sphi 0, %s45
      %s65 = sphi 0, %s65
      %s67 = sphi 0, %s65
      %s68 = sphi 0, %s67
      %s82 = sphi 0, %s68
      %s88 = sphi 0, %s90
      %s91 = sphi 0, %s88
      %s92 = sphi 0, %s91
      %s108 = sphi 0, %s92
      %s112 = sphi 0, %s112
      %s114 = sphi 0, %s112
      %s115 = sphi 0, %s114
      %s129 = sphi 0, %s115
      %s135 = sphi 0, %s137
      %s138 = sphi 0, %s135
      %s139 = sphi 0, %s138
      %s155 = sphi 0, %s139
    $region4: #{tpu_custom_call.1} parent=1 // loop_header_branch
      %20 = sbr.rel (%p18) target = $region8
    $region5: #{tpu_custom_call.1} parent=1 // loop_body
      %s22 = ssub.s32 %s17, 1
      %s23 = ssub.s32 %s17, 2
      %s30 = sadd.s32 1, %s25
      %p31 = scmp.ge.s32.totalorder %s30, 1
      %s32 = scalar_select %p31, 0, %s30
      %s33 = sadd.s32 1, %s24
      %s34 = scalar_select %p31, %s33, %s24
      %p35 = scmp.ge.s32.totalorder %s34, 2
      %s36 = scalar_select %p35, 0, %s34
      %s37 = ssub.s32 %s24, %s36
      %s38 = ssub.s32 %s25, %s32
      %s39 = sor.u32 %s37, %s38
      %p40 = scmp.eq.s32.totalorder %s39, 0
      %s42 = sadd.s32 %s41, 1
      %s43 = scalar_select %p40, %s41, %s42
      %p46 = pneg %p40
      %p47 = scmp.eq.s32.totalorder %s17, 1
      %p48 = por %p46, %p47
      %p49 = scmp.ne.s32.totalorder %s41, %s44
      %p50 = scmp.eq.s32.totalorder %s17, 0
      %p51 = por %p49, %p50
      %p52 = scmp.ne.s32.totalorder %s41, %s44
      %p53 = scmp.eq.s32.totalorder %s22, 1
      %p54 = por %p52, %p53
      %p55 = scmp.ne.s32.totalorder %s44, %s45
      %p56 = scmp.eq.s32.totalorder %s22, 0
      %p57 = por %p55, %p56
      %p58 = scmp.ne.s32.totalorder %s44, %s45
      %p59 = scmp.eq.s32.totalorder %s23, 1
      %p60 = por %p58, %p59
      %p62 = scmp.ne.s32.totalorder %s45, %s61
      %p63 = scmp.eq.s32.totalorder %s23, 0
      %p64 = por %p62, %p63
      %s66 = sadd.s32 %s65, 1
      %p69 = scmp.eq.s32.totalorder %s17, 1
      %p70 = scmp.ne.s32.totalorder %s65, %s67
      %p71 = scmp.eq.s32.totalorder %s17, 0
      %p72 = por %p70, %p71
      %p73 = scmp.ne.s32.totalorder %s65, %s67
      %p74 = scmp.eq.s32.totalorder %s22, 1
      %p75 = por %p73, %p74
      %p76 = scmp.ne.s32.totalorder %s67, %s68
      %p77 = scmp.eq.s32.totalorder %s22, 0
      %p78 = por %p76, %p77
      %p79 = scmp.ne.s32.totalorder %s67, %s68
      %p80 = scmp.eq.s32.totalorder %s23, 1
      %p81 = por %p79, %p80
      %p83 = scmp.ne.s32.totalorder %s68, %s82
      %p84 = scmp.eq.s32.totalorder %s23, 0
      %p85 = por %p83, %p84
      %s86 = ssub.s32 %s25, %s32
      %p87 = scmp.eq.s32.totalorder %s86, 0
      %s89 = sadd.s32 %s88, 1
      %s90 = scalar_select %p87, %s88, %s89
      %p93 = pneg %p87
      %p94 = scmp.eq.s32.totalorder %s17, 1
      %p95 = por %p93, %p94
      %p96 = scmp.ne.s32.totalorder %s88, %s91
      %p97 = scmp.eq.s32.totalorder %s17, 0
      %p98 = por %p96, %p97
      %p99 = scmp.ne.s32.totalorder %s88, %s91
      %p100 = scmp.eq.s32.totalorder %s22, 1
      %p101 = por %p99, %p100
      %p102 = scmp.ne.s32.totalorder %s91, %s92
      %p103 = scmp.eq.s32.totalorder %s22, 0
      %p104 = por %p102, %p103
      %p105 = scmp.ne.s32.totalorder %s91, %s92
      %p106 = scmp.eq.s32.totalorder %s23, 1
      %p107 = por %p105, %p106
      %p109 = scmp.ne.s32.totalorder %s92, %s108
      %p110 = scmp.eq.s32.totalorder %s23, 0
      %p111 = por %p109, %p110
      %s113 = sadd.s32 %s112, 1
      %p116 = scmp.eq.s32.totalorder %s17, 1
      %p117 = scmp.ne.s32.totalorder %s112, %s114
      %p118 = scmp.eq.s32.totalorder %s17, 0
      %p119 = por %p117, %p118
      %p120 = scmp.ne.s32.totalorder %s112, %s114
      %p121 = scmp.eq.s32.totalorder %s22, 1
      %p122 = por %p120, %p121
      %p123 = scmp.ne.s32.totalorder %s114, %s115
      %p124 = scmp.eq.s32.totalorder %s22, 0
      %p125 = por %p123, %p124
      %p126 = scmp.ne.s32.totalorder %s114, %s115
      %p127 = scmp.eq.s32.totalorder %s23, 1
      %p128 = por %p126, %p127
      %p130 = scmp.ne.s32.totalorder %s115, %s129
      %p131 = scmp.eq.s32.totalorder %s23, 0
      %p132 = por %p130, %p131
      %s133 = ssub.s32 %s24, %s36
      %p134 = scmp.eq.s32.totalorder %s133, 0
      %s136 = sadd.s32 %s135, 1
      %s137 = scalar_select %p134, %s135, %s136
      %p140 = pneg %p134
      %p141 = scmp.eq.s32.totalorder %s17, 1
      %p142 = por %p140, %p141
      %p143 = scmp.ne.s32.totalorder %s135, %s138
      %p144 = scmp.eq.s32.totalorder %s17, 0
      %p145 = por %p143, %p144
      %p146 = scmp.ne.s32.totalorder %s135, %s138
      %p147 = scmp.eq.s32.totalorder %s22, 1
      %p148 = por %p146, %p147
      %p149 = scmp.ne.s32.totalorder %s138, %s139
      %p150 = scmp.eq.s32.totalorder %s22, 0
      %p151 = por %p149, %p150
      %p152 = scmp.ne.s32.totalorder %s138, %s139
      %p153 = scmp.eq.s32.totalorder %s23, 1
      %p154 = por %p152, %p153
      %p156 = scmp.ne.s32.totalorder %s139, %s155
      %p157 = scmp.eq.s32.totalorder %s23, 0
      %p158 = por %p156, %p157
      %p159 = scmp.le.s32.totalorder 1, %s17
      %p160 = scmp.lt.s32.totalorder %s17, 3
      %p161 = pnand %p159, %p160
      %p162 = pneg %p161
      // Predicated region
      $region9: #{tpu_custom_call.1} parent=5 // pred_check
        _
      $region10: #{tpu_custom_call.1} parent=5 // pred_check_branch
        %164 = sbr.rel (%p161) target = $region12
      $region11: #{tpu_custom_call.1} parent=5 // pred_region
        %s165 = ssub.s32 %s17, 1
        // Predicated region
        $region13: #{tpu_custom_call.1} parent=11 // pred_check
          %p166 = pneg %p78
        $region14: #{tpu_custom_call.1} parent=11 // pred_check_branch
          %168 = sbr.rel (%p166) target = $region16
        $region15: #{tpu_custom_call.1} parent=11 // pred_region
          %s170 = ssub.s32 4096, 4096
          %171 = vsyncadd [#allocation7], %s170
          %s172 = sshll.u32 [#allocation6], 4
          %s173 = int_to_ptr.vmem [resolvable:$true] %s172
          %178 = dma.hbm_to_vmem [thread:$0]  %s1, 4096, %s173, [#allocation7], 128, 128, 8
        $region16: #{tpu_custom_call.1} parent=11 // pred_fallthru
          _
        // Predicated region
        $region17: #{tpu_custom_call.1} parent=11 // pred_check
          %p179 = pneg %p104
        $region18: #{tpu_custom_call.1} parent=11 // pred_check_branch
          %181 = sbr.rel (%p179) target = $region20
        $region19: #{tpu_custom_call.1} parent=11 // pred_region
          %p182 = scmp.lt.s32.totalorder %s27, 0
          %s183 = scalar_select %p182, %s27, 0
          %s184 = scalar_lea.vmem %s2, %s183
        $region20: #{tpu_custom_call.1} parent=11 // pred_fallthru
          _
        // Predicated region
        $region21: #{tpu_custom_call.1} parent=11 // pred_check
          %p185 = pneg %p125
        $region22: #{tpu_custom_call.1} parent=11 // pred_check_branch
          %187 = sbr.rel (%p185) target = $region24
        $region23: #{tpu_custom_call.1} parent=11 // pred_region
          _
        $region24: #{tpu_custom_call.1} parent=11 // pred_fallthru
          _
      $region12: #{tpu_custom_call.1} parent=5 // pred_fallthru
        _
      %p188 = scmp.lt.s32.totalorder %s17, 2
      // Predicated region
      $region25: #{tpu_custom_call.1} parent=5 // pred_check
        %p189 = pneg %p188
      $region26: #{tpu_custom_call.1} parent=5 // pred_check_branch
        %191 = sbr.rel (%p189) target = $region28
      $region27: #{tpu_custom_call.1} parent=5 // pred_region
        // Predicated region
        $region29: #{tpu_custom_call.1} parent=27 // pred_check
          %p192 = pneg %p51
        $region30: #{tpu_custom_call.1} parent=27 // pred_check_branch
          %194 = sbr.rel (%p192) target = $region32
        $region31: #{tpu_custom_call.1} parent=27 // pred_region
          %s195 = sand.u32 %s41, 1
          %s196 = scalar_lea.sflag [#allocation4], %s195
          %s197 = sand.u32 %s41, 1
          %s198 = smul.addr %s197, 16
          %s199 = scalar_lea.vmem [#allocation3], %s198
          %s201 = ssub.s32 256, 256
          %202 = vsyncadd %s196, %s201
          %s203 = smul.addr %s25, 2
          %s204 = smul.addr %s24, 2
          %s205 = sadd.s32 %s203, %s204
          %s206 = smul.addr %s205, 128
          %s207 = scalar_lea.hbm %s0, %s206
          %s209 = sshll.u32 %s199, 4
          %s210 = int_to_ptr.vmem [resolvable:$true] %s209
          %212 = dma.hbm_to_vmem [thread:$0]  %s207, 256, %s210, %s196
        $region32: #{tpu_custom_call.1} parent=27 // pred_fallthru
          _
      $region28: #{tpu_custom_call.1} parent=5 // pred_fallthru
        _
      %p213 = scmp.le.s32.totalorder 1, %s17
      %p214 = scmp.lt.s32.totalorder %s17, 3
      %p215 = pnand %p213, %p214
      %p216 = pneg %p215
      // Predicated region
      $region33: #{tpu_custom_call.1} parent=5 // pred_check
        _
      $region34: #{tpu_custom_call.1} parent=5 // pred_check_branch
        %218 = sbr.rel (%p215) target = $region36
      $region35: #{tpu_custom_call.1} parent=5 // pred_region
        %s219 = ssub.s32 %s17, 1
        %s220 = sand.u32 %s44, 1
        %s221 = scalar_lea.sflag [#allocation4], %s220
        %s222 = sand.u32 %s44, 1
        %s223 = smul.addr %s222, 16
        %s224 = scalar_lea.vmem [#allocation3], %s223
        // Predicated region
        $region37: #{tpu_custom_call.1} parent=35 // pred_check
          %p225 = pneg %p57
        $region38: #{tpu_custom_call.1} parent=35 // pred_check_branch
          %227 = sbr.rel (%p225) target = $region40
        $region39: #{tpu_custom_call.1} parent=35 // pred_region
          %228 = dma.done %s221, 256
        $region40: #{tpu_custom_call.1} parent=35 // pred_fallthru
          _
        // Predicated region
        $region41: #{tpu_custom_call.1} parent=35 // pred_check
          %p229 = pneg %p78
        $region42: #{tpu_custom_call.1} parent=35 // pred_check_branch
          %231 = sbr.rel (%p229) target = $region44
        $region43: #{tpu_custom_call.1} parent=35 // pred_region
          %232 = dma.done [#allocation7], 4096
        $region44: #{tpu_custom_call.1} parent=35 // pred_fallthru
          _
        %s233 = sand.u32 %s44, 1
        %s234 = scalar_lea.sflag [#allocation4], %s233
        %s235 = sand.u32 %s44, 1
        %s236 = smul.addr %s235, 16
        %s237 = scalar_lea.vmem [#allocation3], %s236
        %p238 = pneg %p57
        %p239 = pneg %p54
        %p240 = pneg %p78
        %p241 = pneg %p75
        %p242 = scmp.lt.s32.totalorder %s27, 0
        %s243 = scalar_select %p242, %s27, 0
        %s244 = scalar_lea.vmem %s2, %s243
        %p245 = pneg %p104
        %p246 = pneg %p101
        %p247 = pneg %p125
        %p248 = pneg %p122
        %p249 = pneg %p151
        %p250 = pneg %p148
        %s251 = sand.u32 %s138, 1
        %s252 = scalar_lea.sflag [#allocation5], %s251
        %s253 = sand.u32 %s138, 1
        %s254 = smul.addr %s253, 4
        %s255 = scalar_lea.vmem [#allocation8], %s254
        %p256 = scmp.lt.s32.totalorder %s27, 0
        %s257 = scalar_select %p256, %s27, 0
        %s258 = scalar_lea.vmem %s2, %s257
        %p260 = scmp.eq.s32.totalorder %s27, 0
        // Predicated region
        $region45: #{tpu_custom_call.1} parent=35 // pred_check
          %p261 = pneg %p260
        $region46: #{tpu_custom_call.1} parent=35 // pred_check_branch
          %263 = sbr.rel (%p261) target = $region48
        $region47: #{tpu_custom_call.1} parent=35 // pred_region
          %vm264 = vcmask 517120
          %265 = vst.msk [vmem:[#allocation2] sm:$0x3] %vm264, 0.0
          %266 = vst.msk [vmem:[#allocation2 + $0x2] sm:$0x3] %vm264, 0.0
          %267 = vst.msk [vmem:[#allocation2 + $0x4] sm:$0x3] %vm264, 0.0
          %268 = vst.msk [vmem:[#allocation2 + $0x6] sm:$0x3] %vm264, 0.0
        $region48: #{tpu_custom_call.1} parent=35 // pred_fallthru
          _
        %v269 = vld [vmem:[%s224] sm:$0xff]
        %v270 = vld [vmem:[%s224 + $0x8] sm:$0xff]
        %v271 = vpack.c.bf16 %v269, %v269
        %v272 = vpack.c.bf16 %v270, %v270
        %v273 = vld [vmem:[#allocation6] sm:$0xff]
        %v274 = vld [vmem:[#allocation6 + $0x8] sm:$0xff]
        %v275 = vld [vmem:[#allocation6 + $0x10] sm:$0xff]
        %v276 = vld [vmem:[#allocation6 + $0x18] sm:$0xff]
        %v277 = vld [vmem:[#allocation6 + $0x20] sm:$0xff]
        %v278 = vld [vmem:[#allocation6 + $0x28] sm:$0xff]
        %v279 = vld [vmem:[#allocation6 + $0x30] sm:$0xff]
        %v280 = vld [vmem:[#allocation6 + $0x38] sm:$0xff]
        %v281 = vld [vmem:[#allocation6 + $0x40] sm:$0xff]
        %v282 = vld [vmem:[#allocation6 + $0x48] sm:$0xff]
        %v283 = vld [vmem:[#allocation6 + $0x50] sm:$0xff]
        %v284 = vld [vmem:[#allocation6 + $0x58] sm:$0xff]
        %v285 = vld [vmem:[#allocation6 + $0x60] sm:$0xff]
        %v286 = vld [vmem:[#allocation6 + $0x68] sm:$0xff]
        %v287 = vld [vmem:[#allocation6 + $0x70] sm:$0xff]
        %v288 = vld [vmem:[#allocation6 + $0x78] sm:$0xff]
        %v289 = vld [vmem:[#allocation6 + $0x80] sm:$0xff]
        %v290 = vld [vmem:[#allocation6 + $0x88] sm:$0xff]
        %v291 = vld [vmem:[#allocation6 + $0x90] sm:$0xff]
        %v292 = vld [vmem:[#allocation6 + $0x98] sm:$0xff]
        %v293 = vld [vmem:[#allocation6 + $0xa0] sm:$0xff]
        %v294 = vld [vmem:[#allocation6 + $0xa8] sm:$0xff]
        %v295 = vld [vmem:[#allocation6 + $0xb0] sm:$0xff]
        %v296 = vld [vmem:[#allocation6 + $0xb8] sm:$0xff]
        %v297 = vld [vmem:[#allocation6 + $0xc0] sm:$0xff]
        %v298 = vld [vmem:[#allocation6 + $0xc8] sm:$0xff]
        %v299 = vld [vmem:[#allocation6 + $0xd0] sm:$0xff]
        %v300 = vld [vmem:[#allocation6 + $0xd8] sm:$0xff]
        %v301 = vld [vmem:[#allocation6 + $0xe0] sm:$0xff]
        %v302 = vld [vmem:[#allocation6 + $0xe8] sm:$0xff]
        %v303 = vld [vmem:[#allocation6 + $0xf0] sm:$0xff]
        %v304 = vld [vmem:[#allocation6 + $0xf8] sm:$0xff]
        %v337 = vunpack.c.l.b16 %v273
        %v338 = vunpack.c.h.b16 %v273
        %v339 = vunpack.c.l.b16 %v274
        %v340 = vunpack.c.h.b16 %v274
        %v341 = vunpack.c.l.b16 %v275
        %v342 = vunpack.c.h.b16 %v275
        %v343 = vunpack.c.l.b16 %v276
        %v344 = vunpack.c.h.b16 %v276
        %v345 = vunpack.c.l.b16 %v277
        %v346 = vunpack.c.h.b16 %v277
        %v347 = vunpack.c.l.b16 %v278
        %v348 = vunpack.c.h.b16 %v278
        %v349 = vunpack.c.l.b16 %v279
        %v350 = vunpack.c.h.b16 %v279
        %v351 = vunpack.c.l.b16 %v280
        %v352 = vunpack.c.h.b16 %v280
        %v353 = vunpack.c.l.b16 %v281
        %v354 = vunpack.c.h.b16 %v281
        %v355 = vunpack.c.l.b16 %v282
        %v356 = vunpack.c.h.b16 %v282
        %v357 = vunpack.c.l.b16 %v283
        %v358 = vunpack.c.h.b16 %v283
        %v359 = vunpack.c.l.b16 %v284
        %v360 = vunpack.c.h.b16 %v284
        %v361 = vunpack.c.l.b16 %v285
        %v362 = vunpack.c.h.b16 %v285
        %v363 = vunpack.c.l.b16 %v286
        %v364 = vunpack.c.h.b16 %v286
        %v365 = vunpack.c.l.b16 %v287
        %v366 = vunpack.c.h.b16 %v287
        %v367 = vunpack.c.l.b16 %v288
        %v368 = vunpack.c.h.b16 %v288
        %v369 = vunpack.c.l.b16 %v289
        %v370 = vunpack.c.h.b16 %v289
        %v371 = vunpack.c.l.b16 %v290
        %v372 = vunpack.c.h.b16 %v290
        %v373 = vunpack.c.l.b16 %v291
        %v374 = vunpack.c.h.b16 %v291
        %v375 = vunpack.c.l.b16 %v292
        %v376 = vunpack.c.h.b16 %v292
        %v377 = vunpack.c.l.b16 %v293
        %v378 = vunpack.c.h.b16 %v293
        %v379 = vunpack.c.l.b16 %v294
        %v380 = vunpack.c.h.b16 %v294
        %v381 = vunpack.c.l.b16 %v295
        %v382 = vunpack.c.h.b16 %v295
        %v383 = vunpack.c.l.b16 %v296
        %v384 = vunpack.c.h.b16 %v296
        %v385 = vunpack.c.l.b16 %v297
        %v386 = vunpack.c.h.b16 %v297
        %v387 = vunpack.c.l.b16 %v298
        %v388 = vunpack.c.h.b16 %v298
        %v389 = vunpack.c.l.b16 %v299
        %v390 = vunpack.c.h.b16 %v299
        %v391 = vunpack.c.l.b16 %v300
        %v392 = vunpack.c.h.b16 %v300
        %v393 = vunpack.c.l.b16 %v301
        %v394 = vunpack.c.h.b16 %v301
        %v395 = vunpack.c.l.b16 %v302
        %v396 = vunpack.c.h.b16 %v302
        %v397 = vunpack.c.l.b16 %v303
        %v398 = vunpack.c.h.b16 %v303
        %v399 = vunpack.c.l.b16 %v304
        %v400 = vunpack.c.h.b16 %v304
        %v401 = vpack.c.b16 %v339, %v337
        %v402 = vpack.c.b16 %v340, %v338
        %v403 = vpack.c.b16 %v343, %v341
        %v404 = vpack.c.b16 %v344, %v342
        %v405 = vpack.c.b16 %v347, %v345
        %v406 = vpack.c.b16 %v348, %v346
        %v407 = vpack.c.b16 %v351, %v349
        %v408 = vpack.c.b16 %v352, %v350
        %v409 = vpack.c.b16 %v355, %v353
        %v410 = vpack.c.b16 %v356, %v354
        %v411 = vpack.c.b16 %v359, %v357
        %v412 = vpack.c.b16 %v360, %v358
        %v413 = vpack.c.b16 %v363, %v361
        %v414 = vpack.c.b16 %v364, %v362
        %v415 = vpack.c.b16 %v367, %v365
        %v416 = vpack.c.b16 %v368, %v366
        %v417 = vpack.c.b16 %v371, %v369
        %v418 = vpack.c.b16 %v372, %v370
        %v419 = vpack.c.b16 %v375, %v373
        %v420 = vpack.c.b16 %v376, %v374
        %v421 = vpack.c.b16 %v379, %v377
        %v422 = vpack.c.b16 %v380, %v378
        %v423 = vpack.c.b16 %v383, %v381
        %v424 = vpack.c.b16 %v384, %v382
        %v425 = vpack.c.b16 %v387, %v385
        %v426 = vpack.c.b16 %v388, %v386
        %v427 = vpack.c.b16 %v391, %v389
        %v428 = vpack.c.b16 %v392, %v390
        %v429 = vpack.c.b16 %v395, %v393
        %v430 = vpack.c.b16 %v396, %v394
        %v431 = vpack.c.b16 %v399, %v397
        %v432 = vpack.c.b16 %v400, %v398
        %465 = vmatprep.subr.bf16.mxu0 %v402
        %466 = vmatpush1.bf16.msra.mxu0 %v401
        %467 = vmatprep.subr.bf16.mxu0 %v404
        %468 = vmatpush1.bf16.msra.mxu0 %v403
        %469 = vmatprep.subr.bf16.mxu0 %v406
        %470 = vmatpush1.bf16.msra.mxu0 %v405
        %471 = vmatprep.subr.bf16.mxu0 %v408
        %472 = vmatpush1.bf16.msra.mxu0 %v407
        %473 = vmatprep.subr.bf16.mxu0 %v410
        %474 = vmatpush1.bf16.msra.mxu0 %v409
        %475 = vmatprep.subr.bf16.mxu0 %v412
        %476 = vmatpush1.bf16.msra.mxu0 %v411
        %477 = vmatprep.subr.bf16.mxu0 %v414
        %478 = vmatpush1.bf16.msra.mxu0 %v413
        %479 = vmatprep.subr.bf16.mxu0 %v416
        %480 = vmatpush1.bf16.msra.mxu0 %v415
        %481 = vmatprep.subr.bf16.mxu0 %v418
        %482 = vmatpush1.bf16.msra.mxu0 %v417
        %483 = vmatprep.subr.bf16.mxu0 %v420
        %484 = vmatpush1.bf16.msra.mxu0 %v419
        %485 = vmatprep.subr.bf16.mxu0 %v422
        %486 = vmatpush1.bf16.msra.mxu0 %v421
        %487 = vmatprep.subr.bf16.mxu0 %v424
        %488 = vmatpush1.bf16.msra.mxu0 %v423
        %489 = vmatprep.subr.bf16.mxu0 %v426
        %490 = vmatpush1.bf16.msra.mxu0 %v425
        %491 = vmatprep.subr.bf16.mxu0 %v428
        %492 = vmatpush1.bf16.msra.mxu0 %v427
        %493 = vmatprep.subr.bf16.mxu0 %v430
        %494 = vmatpush1.bf16.msra.mxu0 %v429
        %495 = vmatprep.subr.bf16.mxu0 %v432
        %496 = vmatpush1.bf16.msra.mxu0 %v431
        %497 = vmatprep.mubr.bf16.mxu0 %v272
        %498 = vmatmul.mubr.bf16.gmra.mrb[0].mxu0 %v271
        %v499 = vpop.f32.mrb[0].mxu0
        %v500 = vadd.f32 0.0, %v499
        %v501 = vpop.f32.mrb[0].mxu0
        %v502 = vadd.f32 0.0, %v501
        %v503 = vpop.f32.mrb[0].mxu0
        %v504 = vpop.f32.mrb[0].mxu0
        %505 = vdwg.mxu0
        %v506 = vpack.c.bf16 %v500, %v500
        %v507 = vpack.c.bf16 %v502, %v502
        %v508 = vld [vmem:[#allocation2] sm:$0x3]
        %v509 = vld [vmem:[%s258] sm:$0x1]
        %vm510 = vcmask 64512
        %v512 = vsel %vm510, %v509, 0
        %vm514 = vcmask 1043456
        %v516 = vsel %vm514, %v506, 0
        %518 = vmatprep.subr.bf16.mxu0 0
        %519 = vmatpush1.bf16.msra.mxu0 %v516
        %520 = vmatprep.subr.bf16.mxu0 0
        %521 = vmatpush1.bf16.msra.mxu0 0
        %522 = vmatprep.subr.bf16.mxu0 0
        %523 = vmatpush1.bf16.msra.mxu0 0
        %524 = vmatprep.subr.bf16.mxu0 0
        %525 = vmatpush1.bf16.msra.mxu0 0
        %526 = vmatprep.subr.bf16.mxu0 0
        %527 = vmatpush1.bf16.msra.mxu0 0
        %528 = vmatprep.subr.bf16.mxu0 0
        %529 = vmatpush1.bf16.msra.mxu0 0
        %530 = vmatprep.subr.bf16.mxu0 0
        %531 = vmatpush1.bf16.msra.mxu0 0
        %532 = vmatprep.subr.bf16.mxu0 0
        %533 = vmatpush1.bf16.msra.mxu0 0
        %534 = vmatprep.subr.bf16.mxu0 0
        %535 = vmatpush1.bf16.msra.mxu0 0
        %536 = vmatprep.subr.bf16.mxu0 0
        %537 = vmatpush1.bf16.msra.mxu0 0
        %538 = vmatprep.subr.bf16.mxu0 0
        %539 = vmatpush1.bf16.msra.mxu0 0
        %540 = vmatprep.subr.bf16.mxu0 0
        %541 = vmatpush1.bf16.msra.mxu0 0
        %542 = vmatprep.subr.bf16.mxu0 0
        %543 = vmatpush1.bf16.msra.mxu0 0
        %544 = vmatprep.subr.bf16.mxu0 0
        %545 = vmatpush1.bf16.msra.mxu0 0
        %546 = vmatprep.subr.bf16.mxu0 0
        %547 = vmatpush1.bf16.msra.mxu0 0
        %548 = vmatprep.subr.bf16.mxu0 0
        %549 = vmatpush1.bf16.msra.mxu0 0
        %550 = vmatprep.mubr.bf16.mxu0 0
        %551 = vmatmul.mubr.bf16.gmra.mrb[0].mxu0 %v512
        %v552 = vpop.f32.mrb[0].mxu0
        %v553 = vadd.f32 0.0, %v552
        %v554 = vpop.f32.mrb[0].mxu0
        %v555 = vpop.f32.mrb[0].mxu0
        %v556 = vpop.f32.mrb[0].mxu0
        %557 = vdwg.mxu0
        %v558 = vadd.f32 %v508, %v553
        %vm559 = vcmask 517120
        %560 = vst.msk [vmem:[#allocation2] sm:$0x3] %vm559, %v558
        %s561 = scalar_lea.vmem [#allocation2], 2
        %v562 = vld [vmem:[%s561] sm:$0x3]
        %s563 = scalar_lea.vmem %s258, 1
        %v564 = vld [vmem:[%s563] sm:$0x1]
        %566 = vrot.lane.b32.xlu0 %v506, 64
        %v567 = vpop.permute.xlu0 %566
        %v569 = vsel %vm510, %v564, 0
        %v572 = vsel %vm514, %v567, 0
        %574 = vmatprep.subr.bf16.mxu0 0
        %575 = vmatpush1.bf16.msra.mxu0 %v572
        %576 = vmatprep.subr.bf16.mxu0 0
        %577 = vmatpush1.bf16.msra.mxu0 0
        %578 = vmatprep.subr.bf16.mxu0 0
        %579 = vmatpush1.bf16.msra.mxu0 0
        %580 = vmatprep.subr.bf16.mxu0 0
        %581 = vmatpush1.bf16.msra.mxu0 0
        %582 = vmatprep.subr.bf16.mxu0 0
        %583 = vmatpush1.bf16.msra.mxu0 0
        %584 = vmatprep.subr.bf16.mxu0 0
        %585 = vmatpush1.bf16.msra.mxu0 0
        %586 = vmatprep.subr.bf16.mxu0 0
        %587 = vmatpush1.bf16.msra.mxu0 0
        %588 = vmatprep.subr.bf16.mxu0 0
        %589 = vmatpush1.bf16.msra.mxu0 0
        %590 = vmatprep.subr.bf16.mxu0 0
        %591 = vmatpush1.bf16.msra.mxu0 0
        %592 = vmatprep.subr.bf16.mxu0 0
        %593 = vmatpush1.bf16.msra.mxu0 0
        %594 = vmatprep.subr.bf16.mxu0 0
        %595 = vmatpush1.bf16.msra.mxu0 0
        %596 = vmatprep.subr.bf16.mxu0 0
        %597 = vmatpush1.bf16.msra.mxu0 0
        %598 = vmatprep.subr.bf16.mxu0 0
        %599 = vmatpush1.bf16.msra.mxu0 0
        %600 = vmatprep.subr.bf16.mxu0 0
        %601 = vmatpush1.bf16.msra.mxu0 0
        %602 = vmatprep.subr.bf16.mxu0 0
        %603 = vmatpush1.bf16.msra.mxu0 0
        %604 = vmatprep.subr.bf16.mxu0 0
        %605 = vmatpush1.bf16.msra.mxu0 0
        %606 = vmatprep.mubr.bf16.mxu0 0
        %607 = vmatmul.mubr.bf16.gmra.mrb[0].mxu0 %v569
        %v608 = vpop.f32.mrb[0].mxu0
        %v609 = vadd.f32 0.0, %v608
        %v610 = vpop.f32.mrb[0].mxu0
        %v611 = vpop.f32.mrb[0].mxu0
        %v612 = vpop.f32.mrb[0].mxu0
        %613 = vdwg.mxu0
        %v614 = vadd.f32 %v562, %v609
        %615 = vst.msk [vmem:[%s561] sm:$0x3] %vm559, %v614
        %s616 = scalar_lea.vmem [#allocation2], 4
        %v617 = vld [vmem:[%s616] sm:$0x3]
        %s618 = scalar_lea.vmem %s258, 2
        %v619 = vld [vmem:[%s618] sm:$0x1]
        %v621 = vsel %vm510, %v619, 0
        %v624 = vsel %vm514, %v507, 0
        %626 = vmatprep.subr.bf16.mxu0 0
        %627 = vmatpush1.bf16.msra.mxu0 %v624
        %628 = vmatprep.subr.bf16.mxu0 0
        %629 = vmatpush1.bf16.msra.mxu0 0
        %630 = vmatprep.subr.bf16.mxu0 0
        %631 = vmatpush1.bf16.msra.mxu0 0
        %632 = vmatprep.subr.bf16.mxu0 0
        %633 = vmatpush1.bf16.msra.mxu0 0
        %634 = vmatprep.subr.bf16.mxu0 0
        %635 = vmatpush1.bf16.msra.mxu0 0
        %636 = vmatprep.subr.bf16.mxu0 0
        %637 = vmatpush1.bf16.msra.mxu0 0
        %638 = vmatprep.subr.bf16.mxu0 0
        %639 = vmatpush1.bf16.msra.mxu0 0
        %640 = vmatprep.subr.bf16.mxu0 0
        %641 = vmatpush1.bf16.msra.mxu0 0
        %642 = vmatprep.subr.bf16.mxu0 0
        %643 = vmatpush1.bf16.msra.mxu0 0
        %644 = vmatprep.subr.bf16.mxu0 0
        %645 = vmatpush1.bf16.msra.mxu0 0
        %646 = vmatprep.subr.bf16.mxu0 0
        %647 = vmatpush1.bf16.msra.mxu0 0
        %648 = vmatprep.subr.bf16.mxu0 0
        %649 = vmatpush1.bf16.msra.mxu0 0
        %650 = vmatprep.subr.bf16.mxu0 0
        %651 = vmatpush1.bf16.msra.mxu0 0
        %652 = vmatprep.subr.bf16.mxu0 0
        %653 = vmatpush1.bf16.msra.mxu0 0
        %654 = vmatprep.subr.bf16.mxu0 0
        %655 = vmatpush1.bf16.msra.mxu0 0
        %656 = vmatprep.subr.bf16.mxu0 0
        %657 = vmatpush1.bf16.msra.mxu0 0
        %658 = vmatprep.mubr.bf16.mxu0 0
        %659 = vmatmul.mubr.bf16.gmra.mrb[0].mxu0 %v621
        %v660 = vpop.f32.mrb[0].mxu0
        %v661 = vadd.f32 0.0, %v660
        %v662 = vpop.f32.mrb[0].mxu0
        %v663 = vpop.f32.mrb[0].mxu0
        %v664 = vpop.f32.mrb[0].mxu0
        %665 = vdwg.mxu0
        %v666 = vadd.f32 %v617, %v661
        %667 = vst.msk [vmem:[%s616] sm:$0x3] %vm559, %v666
        %s668 = scalar_lea.vmem [#allocation2], 6
        %v669 = vld [vmem:[%s668] sm:$0x3]
        %s670 = scalar_lea.vmem %s258, 3
        %v671 = vld [vmem:[%s670] sm:$0x1]
        %673 = vrot.lane.b32.xlu0 %v507, 64
        %v674 = vpop.permute.xlu0 %673
        %v676 = vsel %vm510, %v671, 0
        %v679 = vsel %vm514, %v674, 0
        %681 = vmatprep.subr.bf16.mxu0 0
        %682 = vmatpush1.bf16.msra.mxu0 %v679
        %683 = vmatprep.subr.bf16.mxu0 0
        %684 = vmatpush1.bf16.msra.mxu0 0
        %685 = vmatprep.subr.bf16.mxu0 0
        %686 = vmatpush1.bf16.msra.mxu0 0
        %687 = vmatprep.subr.bf16.mxu0 0
        %688 = vmatpush1.bf16.msra.mxu0 0
        %689 = vmatprep.subr.bf16.mxu0 0
        %690 = vmatpush1.bf16.msra.mxu0 0
        %691 = vmatprep.subr.bf16.mxu0 0
        %692 = vmatpush1.bf16.msra.mxu0 0
        %693 = vmatprep.subr.bf16.mxu0 0
        %694 = vmatpush1.bf16.msra.mxu0 0
        %695 = vmatprep.subr.bf16.mxu0 0
        %696 = vmatpush1.bf16.msra.mxu0 0
        %697 = vmatprep.subr.bf16.mxu0 0
        %698 = vmatpush1.bf16.msra.mxu0 0
        %699 = vmatprep.subr.bf16.mxu0 0
        %700 = vmatpush1.bf16.msra.mxu0 0
        %701 = vmatprep.subr.bf16.mxu0 0
        %702 = vmatpush1.bf16.msra.mxu0 0
        %703 = vmatprep.subr.bf16.mxu0 0
        %704 = vmatpush1.bf16.msra.mxu0 0
        %705 = vmatprep.subr.bf16.mxu0 0
        %706 = vmatpush1.bf16.msra.mxu0 0
        %707 = vmatprep.subr.bf16.mxu0 0
        %708 = vmatpush1.bf16.msra.mxu0 0
        %709 = vmatprep.subr.bf16.mxu0 0
        %710 = vmatpush1.bf16.msra.mxu0 0
        %711 = vmatprep.subr.bf16.mxu0 0
        %712 = vmatpush1.bf16.msra.mxu0 0
        %713 = vmatprep.mubr.bf16.mxu0 0
        %714 = vmatmul.mubr.bf16.gmra.mrb[0].mxu0 %v676
        %v715 = vpop.f32.mrb[0].mxu0
        %v716 = vadd.f32 0.0, %v715
        %v717 = vpop.f32.mrb[0].mxu0
        %v718 = vpop.f32.mrb[0].mxu0
        %v719 = vpop.f32.mrb[0].mxu0
        %720 = vdwg.mxu0
        %v721 = vadd.f32 %v669, %v716
        %722 = vst.msk [vmem:[%s668] sm:$0x3] %vm559, %v721
        // Predicated region
        $region49: #{tpu_custom_call.1} parent=35 // pred_check
          %p723 = pneg %p260
        $region50: #{tpu_custom_call.1} parent=35 // pred_check_branch
          %725 = sbr.rel (%p723) target = $region52
        $region51: #{tpu_custom_call.1} parent=35 // pred_region
          %v726 = vld [vmem:[#allocation2] sm:$0x3]
          %v727 = vld [vmem:[#allocation2 + $0x2] sm:$0x3]
          %v728 = vld [vmem:[#allocation2 + $0x4] sm:$0x3]
          %v729 = vld [vmem:[#allocation2 + $0x6] sm:$0x3]
          %v730 = vld [vmem:[%s3] sm:$0x3]
          %v731 = vld [vmem:[%s3 + $0x2] sm:$0x3]
          %v732 = vld [vmem:[%s3 + $0x4] sm:$0x3]
          %v733 = vld [vmem:[%s3 + $0x6] sm:$0x3]
          %735 = vset.pattern.permute.xlu0 0
          %736 = vperm.xlu0 %735, %v730
          %v737 = vpop.permute.xlu0 %736
          %740 = vset.pattern.permute.xlu0 0
          %741 = vperm.xlu0 %740, %v731
          %v742 = vpop.permute.xlu0 %741
          %745 = vset.pattern.permute.xlu0 0
          %746 = vperm.xlu0 %745, %v732
          %v747 = vpop.permute.xlu0 %746
          %750 = vset.pattern.permute.xlu0 0
          %751 = vperm.xlu0 %750, %v733
          %v752 = vpop.permute.xlu0 %751
          %v754 = vadd.f32 %v726, %v737
          %v755 = vadd.f32 %v727, %v742
          %v756 = vadd.f32 %v728, %v747
          %v757 = vadd.f32 %v729, %v752
          %v758 = vmax.f32 %v754, 0.0
          %v759 = vmax.f32 %v755, 0.0
          %v760 = vmax.f32 %v756, 0.0
          %v761 = vmax.f32 %v757, 0.0
          %v762 = vpack.c.bf16 %v758, %v758
          %v763 = vpack.c.bf16 %v759, %v759
          %v764 = vpack.c.bf16 %v760, %v760
          %v765 = vpack.c.bf16 %v761, %v761
          %vm766 = vcmask 516096
          %767 = vst.msk [vmem:[%s255] sm:$0x1] %vm766, %v762
          %768 = vst.msk [vmem:[%s255 + $0x1] sm:$0x1] %vm766, %v763
          %769 = vst.msk [vmem:[%s255 + $0x2] sm:$0x1] %vm766, %v764
          %770 = vst.msk [vmem:[%s255 + $0x3] sm:$0x1] %vm766, %v765
        $region52: #{tpu_custom_call.1} parent=35 // pred_fallthru
          _
        %s771 = sand.u32 %s138, 1
        %s772 = scalar_lea.sflag [#allocation5], %s771
        %s773 = sand.u32 %s138, 1
        %s774 = smul.addr %s773, 4
        %s775 = scalar_lea.vmem [#allocation8], %s774
        // Predicated region
        $region53: #{tpu_custom_call.1} parent=35 // pred_check
          %p776 = pneg %p148
        $region54: #{tpu_custom_call.1} parent=35 // pred_check_branch
          %778 = sbr.rel (%p776) target = $region56
        $region55: #{tpu_custom_call.1} parent=35 // pred_region
          %s780 = ssub.s32 64, 64
          %781 = vsyncadd %s772, %s780
          %s782 = smul.addr %s26, 4
          %s783 = smul.addr %s782, 16
          %s784 = scalar_lea.hbm %s4, %s783
          %s785 = sshll.u32 %s775, 4
          %s786 = int_to_ptr.vmem [resolvable:$true] %s785
          %791 = dma.vmem_to_hbm [thread:$0]  %s786, 64, %s784, %s772, 16, 16, 1
        $region56: #{tpu_custom_call.1} parent=35 // pred_fallthru
          _
      $region36: #{tpu_custom_call.1} parent=5 // pred_fallthru
        _
      %p792 = scmp.le.s32.totalorder 2, %s17
      // Predicated region
      $region57: #{tpu_custom_call.1} parent=5 // pred_check
        %p793 = pneg %p792
      $region58: #{tpu_custom_call.1} parent=5 // pred_check_branch
        %795 = sbr.rel (%p793) target = $region60
      $region59: #{tpu_custom_call.1} parent=5 // pred_region
        %s796 = ssub.s32 %s17, 2
        // Predicated region
        $region61: #{tpu_custom_call.1} parent=59 // pred_check
          %p797 = pneg %p154
        $region62: #{tpu_custom_call.1} parent=59 // pred_check_branch
          %799 = sbr.rel (%p797) target = $region64
        $region63: #{tpu_custom_call.1} parent=59 // pred_region
          %s800 = sand.u32 %s139, 1
          %s801 = scalar_lea.sflag [#allocation5], %s800
          %s802 = sand.u32 %s139, 1
          %s803 = smul.addr %s802, 4
          %s804 = scalar_lea.vmem [#allocation8], %s803
          %805 = dma.done %s801, 64
        $region64: #{tpu_custom_call.1} parent=59 // pred_fallthru
          _
      $region60: #{tpu_custom_call.1} parent=5 // pred_fallthru
        _
    $region6: #{tpu_custom_call.1} parent=1 // loop_footer
      %s21 = sadd.s32 1, %s17
    $region7: #{tpu_custom_call.1} parent=1 // loop_footer_branch
      %16 = sbr.rel target = $region3
    $region8: #{tpu_custom_call.1} parent=1 // loop_exit
      _
    %806 = vsyncpa [#allocation4], 1
    %s807 = scalar_lea.sflag [#allocation4], 1
    %808 = vsyncpa %s807, 1
    %809 = vsyncpa [#allocation7], 1
    %810 = vsyncpa [#allocation5], 1
    %s811 = scalar_lea.sflag [#allocation5], 1
    %812 = vsyncpa %s811, 1

</llo_original>
